<compile_context>
chip_gen: v6e
topology: v6e:2x2x1
jax: 0.10.0
libtpu: 0.0.40
codegen_flags: <defaults>
</compile_context>

<pallas_src>
import jax
import jax.numpy as jnp
from jax.experimental import pallas as pl
from jax.experimental.pallas import tpu as pltpu

# ----------------------------- model config ---------------------------------
INPUT_SIZE = 32
FC_HIDDEN_SIZES = [64, 32]
OUTPUT_SIZE = 8
BATCH = 256

LANE = 128      # lane width: hidden/output feature dims padded to this
SUBLANE = 8     # batch padded to a multiple of this


def _round_up(n, m):
    return (n + m - 1) // m * m


# ------------------------------ Pallas kernel --------------------------------
def mlp_kernel(x_ref, w1_ref, b1_ref, w2_ref, b2_ref, w3_ref, b3_ref, o_ref):
    # Cast to bf16 only at the MXU boundary; f32 accumulation; f32 elementwise.
    x = x_ref[...]
    # Layer 1: Linear + ReLU (padded hidden cols: 0*x + 0 bias -> ReLU -> 0)
    h = jnp.dot(x.astype(jnp.bfloat16), w1_ref[...],
                preferred_element_type=jnp.float32)
    h = jnp.maximum(h + b1_ref[...], 0.0)
    # Layer 2: Linear + ReLU
    h = jnp.dot(h.astype(jnp.bfloat16), w2_ref[...],
                preferred_element_type=jnp.float32)
    h = jnp.maximum(h + b2_ref[...], 0.0)
    # Output layer: Linear + Sigmoid (EUP path); padded output cols sliced off outside.
    h = jnp.dot(h.astype(jnp.bfloat16), w3_ref[...],
                preferred_element_type=jnp.float32)
    o_ref[...] = jax.nn.sigmoid(h + b3_ref[...]).astype(o_ref.dtype)


# ------------------------------ host wrappers ---------------------------------
def prepare_padded_params(params):
    """ONE-TIME init: zero-pad feature dims to 128 lanes.

    Weights -> bf16 (MXU-native); biases stay f32 with shape (1, padded_cols)
    and are broadcast inside the kernel.
    """
    w1, b1, w2, b2, w3, b3 = params
    h1p = _round_up(w1.shape[1], LANE)
    h2p = _round_up(w2.shape[1], LANE)
    op = _round_up(w3.shape[1], LANE)

    def pad_w(w, rows, cols):
        full = jnp.zeros((rows, cols), jnp.float32)
        return full.at[: w.shape[0], : w.shape[1]].set(w).astype(jnp.bfloat16)

    def pad_b(b, cols):
        return jnp.zeros((1, cols), jnp.float32).at[:, : b.shape[1]].set(b)

    return (
        pad_w(w1, w1.shape[0], h1p), pad_b(b1, h1p),
        pad_w(w2, h1p, h2p), pad_b(b2, h2p),
        pad_w(w3, h2p, op), pad_b(b3, op),
    )


@jax.jit
def model_fc_forward(x, padded_params):
    """x: (batch, INPUT_SIZE) f32. Batch padding, kernel call and output slice
    are all inside this single jit."""
    w1, b1, w2, b2, w3, b3 = padded_params
    batch, in_size = x.shape
    h1p, h2p, op = w1.shape[1], w2.shape[1], w3.shape[1]

    bp = _round_up(batch, SUBLANE)
    if bp != batch:
        x = jnp.zeros((bp, in_size), x.dtype).at[:batch].set(x)

    flops = 2 * bp * (in_size * h1p + h1p * h2p + h2p * op)
    bytes_accessed = (
        4 * bp * in_size
        + 2 * (w1.size + w2.size + w3.size)          # bf16 weights
        + 4 * (b1.size + b2.size + b3.size)          # f32 biases
        + 4 * bp * op                                # f32 output
    )

    out_padded = pl.pallas_call(
        mlp_kernel,
        out_shape=jax.ShapeDtypeStruct((bp, op), jnp.float32),
        grid_spec=pltpu.PrefetchScalarGridSpec(
            num_scalar_prefetch=0,
            grid=(1,),  # single step: whole problem fits in VMEM, no pipelining needed
            in_specs=[
                pl.BlockSpec((bp, in_size), lambda i: (0, 0)),  # full batch
                pl.BlockSpec(w1.shape, lambda i: (0, 0)),       # resident weights/biases
                pl.BlockSpec(b1.shape, lambda i: (0, 0)),
                pl.BlockSpec(w2.shape, lambda i: (0, 0)),
                pl.BlockSpec(b2.shape, lambda i: (0, 0)),
                pl.BlockSpec(w3.shape, lambda i: (0, 0)),
                pl.BlockSpec(b3.shape, lambda i: (0, 0)),
            ],
            out_specs=pl.BlockSpec((bp, op), lambda i: (0, 0)),
        ),
        compiler_params=pltpu.CompilerParams(
            dimension_semantics=("arbitrary",),
        ),
        cost_estimate=pl.CostEstimate(
            flops=flops,
            transcendentals=bp * op,
            bytes_accessed=bytes_accessed,
        ),
    )(x, w1, b1, w2, b2, w3, b3)

    # Slice off batch padding and the zero-padded output columns (folded into jit).
    return out_padded[:batch, :OUTPUT_SIZE]


# --------------------------- deterministic params ----------------------------
def init_params(key):
    sizes = [INPUT_SIZE] + FC_HIDDEN_SIZES + [OUTPUT_SIZE]
    params = []
    for fan_in, fan_out in zip(sizes[:-1], sizes[1:]):
        kw, kb, key = jax.random.split(key, 3)
        bound = 1.0 / jnp.sqrt(fan_in)  # mimic nn.Linear default init range
        w = jax.random.uniform(kw, (fan_in, fan_out), jnp.float32, -bound, bound)
        b = jax.random.uniform(kb, (1, fan_out), jnp.float32, -bound, bound)
        params += [w, b]
    return tuple(params)


# --------------------------------- main ---------------------------------------
if __name__ == "__main__":
    key = jax.random.PRNGKey(0)
    kx, kp = jax.random.split(key)
    x = jax.random.normal(kx, (BATCH, INPUT_SIZE), jnp.float32)
    params = init_params(kp)

    # One-time parameter preprocessing (hoisted out of the per-call path).
    padded_params = prepare_padded_params(params)
    padded_params = jax.block_until_ready(padded_params)

    out = model_fc_forward(x, padded_params)
    out = jax.block_until_ready(out)

    # Sanity-check against plain f32 JAX reference (unpadded params).
    w1, b1, w2, b2, w3, b3 = params
    h = jnp.maximum(x @ w1 + b1, 0.0)
    h = jnp.maximum(h @ w2 + b2, 0.0)
    ref = jax.nn.sigmoid(h @ w3 + b3)

    assert out.shape == (BATCH, OUTPUT_SIZE)
    # bf16 weights / bf16-at-the-dot activations with f32 accumulation:
    # tolerance loosened per review (f32 reference).
    assert jnp.allclose(out, ref, atol=2e-2, rtol=2e-2)

    print("KERNEL_OK")
</pallas_src>

<mosaic_0001>
module attributes {stable_mosaic.version = 11 : i64} {
  func.func @mlp_kernel(%arg0: i32, %arg1: memref<256x32xf32, #tpu.memory_space<vmem>>, %arg2: memref<32x128xbf16, #tpu.memory_space<vmem>>, %arg3: memref<1x128xf32, #tpu.memory_space<vmem>>, %arg4: memref<128x128xbf16, #tpu.memory_space<vmem>>, %arg5: memref<1x128xf32, #tpu.memory_space<vmem>>, %arg6: memref<128x128xbf16, #tpu.memory_space<vmem>>, %arg7: memref<1x128xf32, #tpu.memory_space<vmem>>, %arg8: memref<256x128xf32, #tpu.memory_space<vmem>>) attributes {dimension_semantics = [#tpu.dimension_semantics<arbitrary>], iteration_bounds = array<i64: 1>, scalar_prefetch = 0 : i64, scratch_operands = 0 : i64, tpu.core_type = #tpu.core_type<tc>, window_params = [{pipeline_mode = #tpu.pipeline_mode<synchronous>, transform_indices = @transform_0, window_bounds = array<i64: 256, 32>}, {pipeline_mode = #tpu.pipeline_mode<synchronous>, transform_indices = @transform_1, window_bounds = array<i64: 32, 128>}, {pipeline_mode = #tpu.pipeline_mode<synchronous>, transform_indices = @transform_2, window_bounds = array<i64: 1, 128>}, {pipeline_mode = #tpu.pipeline_mode<synchronous>, transform_indices = @transform_3, window_bounds = array<i64: 128, 128>}, {pipeline_mode = #tpu.pipeline_mode<synchronous>, transform_indices = @transform_4, window_bounds = array<i64: 1, 128>}, {pipeline_mode = #tpu.pipeline_mode<synchronous>, transform_indices = @transform_5, window_bounds = array<i64: 128, 128>}, {pipeline_mode = #tpu.pipeline_mode<synchronous>, transform_indices = @transform_6, window_bounds = array<i64: 1, 128>}, {pipeline_mode = #tpu.pipeline_mode<synchronous>, transform_indices = @transform_7, window_bounds = array<i64: 256, 128>}]} {
    %c0 = arith.constant 0 : index
    %c0_0 = arith.constant 0 : index
    %0 = vector.load %arg1[%c0, %c0_0] : memref<256x32xf32, #tpu.memory_space<vmem>>, vector<256x32xf32>
    %1 = arith.truncf %0 : vector<256x32xf32> to vector<256x32xbf16>
    %c0_1 = arith.constant 0 : index
    %c0_2 = arith.constant 0 : index
    %2 = vector.load %arg2[%c0_1, %c0_2] : memref<32x128xbf16, #tpu.memory_space<vmem>>, vector<32x128xbf16>
    %cst = arith.constant dense<0.000000e+00> : vector<256x128xf32>
    %3 = tpu.matmul %1, %2, %cst {dimension_numbers = #tpu.dot_dimension_numbers<[1], [0], [0], [1], [0, 0, 1, 1], [], []>} : vector<256x32xbf16>, vector<32x128xbf16>, vector<256x128xf32> -> vector<256x128xf32>
    %c0_3 = arith.constant 0 : index
    %c0_4 = arith.constant 0 : index
    %4 = vector.load %arg3[%c0_3, %c0_4] : memref<1x128xf32, #tpu.memory_space<vmem>>, vector<1x128xf32>
    %5 = vector.broadcast %4 : vector<1x128xf32> to vector<256x128xf32>
    %6 = arith.addf %3, %5 : vector<256x128xf32>
    %cst_5 = arith.constant 0.000000e+00 : f32
    %7 = vector.broadcast %cst_5 : f32 to vector<256x128xf32>
    %8 = arith.maximumf %6, %7 : vector<256x128xf32>
    %9 = arith.truncf %8 : vector<256x128xf32> to vector<256x128xbf16>
    %c0_6 = arith.constant 0 : index
    %c0_7 = arith.constant 0 : index
    %10 = vector.load %arg4[%c0_6, %c0_7] : memref<128x128xbf16, #tpu.memory_space<vmem>>, vector<128x128xbf16>
    %cst_8 = arith.constant dense<0.000000e+00> : vector<256x128xf32>
    %11 = tpu.matmul %9, %10, %cst_8 {dimension_numbers = #tpu.dot_dimension_numbers<[1], [0], [0], [1], [0, 0, 1, 1], [], []>} : vector<256x128xbf16>, vector<128x128xbf16>, vector<256x128xf32> -> vector<256x128xf32>
    %c0_9 = arith.constant 0 : index
    %c0_10 = arith.constant 0 : index
    %12 = vector.load %arg5[%c0_9, %c0_10] : memref<1x128xf32, #tpu.memory_space<vmem>>, vector<1x128xf32>
    %13 = vector.broadcast %12 : vector<1x128xf32> to vector<256x128xf32>
    %14 = arith.addf %11, %13 : vector<256x128xf32>
    %cst_11 = arith.constant 0.000000e+00 : f32
    %15 = vector.broadcast %cst_11 : f32 to vector<256x128xf32>
    %16 = arith.maximumf %14, %15 : vector<256x128xf32>
    %17 = arith.truncf %16 : vector<256x128xf32> to vector<256x128xbf16>
    %c0_12 = arith.constant 0 : index
    %c0_13 = arith.constant 0 : index
    %18 = vector.load %arg6[%c0_12, %c0_13] : memref<128x128xbf16, #tpu.memory_space<vmem>>, vector<128x128xbf16>
    %cst_14 = arith.constant dense<0.000000e+00> : vector<256x128xf32>
    %19 = tpu.matmul %17, %18, %cst_14 {dimension_numbers = #tpu.dot_dimension_numbers<[1], [0], [0], [1], [0, 0, 1, 1], [], []>} : vector<256x128xbf16>, vector<128x128xbf16>, vector<256x128xf32> -> vector<256x128xf32>
    %c0_15 = arith.constant 0 : index
    %c0_16 = arith.constant 0 : index
    %20 = vector.load %arg7[%c0_15, %c0_16] : memref<1x128xf32, #tpu.memory_space<vmem>>, vector<1x128xf32>
    %21 = vector.broadcast %20 : vector<1x128xf32> to vector<256x128xf32>
    %22 = arith.addf %19, %21 : vector<256x128xf32>
    %23 = arith.negf %22 : vector<256x128xf32>
    %24 = math.exp %23 : vector<256x128xf32>
    %cst_17 = arith.constant 1.000000e+00 : f32
    %25 = vector.broadcast %cst_17 : f32 to vector<256x128xf32>
    %26 = arith.addf %25, %24 : vector<256x128xf32>
    %27 = arith.divf %25, %26 : vector<256x128xf32>
    %c0_18 = arith.constant 0 : index
    %c0_19 = arith.constant 0 : index
    %28 = vector.load %arg8[%c0_18, %c0_19] : memref<256x128xf32, #tpu.memory_space<vmem>>, vector<256x128xf32>
    tpu.vector_store %arg8[%c0_18, %c0_19], %27 {strides = array<i32>} : memref<256x128xf32, #tpu.memory_space<vmem>>, vector<256x128xf32>,
    return
  }
  func.func @transform_0(%arg0: i32) -> (i32, i32) {
    %c0_i32 = arith.constant 0 : i32
    %c0_i32_0 = arith.constant 0 : i32
    %c0_i32_1 = arith.constant 0 : i32
    return %c0_i32, %c0_i32_0 : i32, i32
  }
  func.func @transform_1(%arg0: i32) -> (i32, i32) {
    %c0_i32 = arith.constant 0 : i32
    %c0_i32_0 = arith.constant 0 : i32
    %c0_i32_1 = arith.constant 0 : i32
    return %c0_i32, %c0_i32_0 : i32, i32
  }
  func.func @transform_2(%arg0: i32) -> (i32, i32) {
    %c0_i32 = arith.constant 0 : i32
    %c0_i32_0 = arith.constant 0 : i32
    %c0_i32_1 = arith.constant 0 : i32
    return %c0_i32, %c0_i32_0 : i32, i32
  }
  func.func @transform_3(%arg0: i32) -> (i32, i32) {
    %c0_i32 = arith.constant 0 : i32
    %c0_i32_0 = arith.constant 0 : i32
    %c0_i32_1 = arith.constant 0 : i32
    return %c0_i32, %c0_i32_0 : i32, i32
  }
  func.func @transform_4(%arg0: i32) -> (i32, i32) {
    %c0_i32 = arith.constant 0 : i32
    %c0_i32_0 = arith.constant 0 : i32
    %c0_i32_1 = arith.constant 0 : i32
    return %c0_i32, %c0_i32_0 : i32, i32
  }
  func.func @transform_5(%arg0: i32) -> (i32, i32) {
    %c0_i32 = arith.constant 0 : i32
    %c0_i32_0 = arith.constant 0 : i32
    %c0_i32_1 = arith.constant 0 : i32
    return %c0_i32, %c0_i32_0 : i32, i32
  }
  func.func @transform_6(%arg0: i32) -> (i32, i32) {
    %c0_i32 = arith.constant 0 : i32
    %c0_i32_0 = arith.constant 0 : i32
    %c0_i32_1 = arith.constant 0 : i32
    return %c0_i32, %c0_i32_0 : i32, i32
  }
  func.func @transform_7(%arg0: i32) -> (i32, i32) {
    %c0_i32 = arith.constant 0 : i32
    %c0_i32_0 = arith.constant 0 : i32
    %c0_i32_1 = arith.constant 0 : i32
    return %c0_i32, %c0_i32_0 : i32, i32
  }
}

</mosaic_0001>

<llo_original>
// kernel: model_fc_forward.1
$region0: #{model_fc_forward.1}
  #allocation0 [shape = 'u32[]', space=smem, size = 0x4, offset = 0x4, fixed_abs, tag = 'smem constant byte address 0x4 - core index']
  #allocation1 [shape = 'u32[144,128]{1,0:T(1,128)}', space=vmem, size = 0x12000, scoped, tag = 'internal scratch']
  %s0 = inlined_call_operand.vmem [shape: f32[256,32], index: 0, kind: input, shape index: {}]
  %s1 = inlined_call_operand.vmem [shape: bf16[32,128], index: 1, kind: input, shape index: {}]
  %s2 = inlined_call_operand.vmem [shape: f32[1,128], index: 2, kind: input, shape index: {}]
  %s3 = inlined_call_operand.vmem [shape: bf16[128,128], index: 3, kind: input, shape index: {}]
  %s4 = inlined_call_operand.vmem [shape: f32[1,128], index: 4, kind: input, shape index: {}]
  %s5 = inlined_call_operand.vmem [shape: bf16[128,128], index: 5, kind: input, shape index: {}]
  %s6 = inlined_call_operand.vmem [shape: f32[1,128], index: 6, kind: input, shape index: {}]
  %s7 = inlined_call_operand.vmem [shape: f32[256,128], index: 7, kind: output, shape index: {}]
  %s8 = sld [smem:[#allocation0]]
  $region38: #{model_fc_forward.1} parent=0
    _
  %s10 = ssub.s32 1, %s8
  %s11 = scalar_select 0, %s10, %s8
  // Predicated region
  $region2: #{model_fc_forward.1} parent=0 // pred_check
    _
  $region3: #{model_fc_forward.1} parent=0 // pred_check_branch
    %13 = sbr.rel (0) target = $region5
  $region4: #{model_fc_forward.1} parent=0 // pred_region
    _
  $region5: #{model_fc_forward.1} parent=0 // pred_fallthru
    _
  // Predicated region
  $region6: #{model_fc_forward.1} parent=0 // pred_check
    _
  $region7: #{model_fc_forward.1} parent=0 // pred_check_branch
    %15 = sbr.rel (0) target = $region9
  $region8: #{model_fc_forward.1} parent=0 // pred_region
    _
  $region9: #{model_fc_forward.1} parent=0 // pred_fallthru
    _
  // Predicated region
  $region10: #{model_fc_forward.1} parent=0 // pred_check
    _
  $region11: #{model_fc_forward.1} parent=0 // pred_check_branch
    %17 = sbr.rel (0) target = $region13
  $region12: #{model_fc_forward.1} parent=0 // pred_region
    _
  $region13: #{model_fc_forward.1} parent=0 // pred_fallthru
    _
  // Predicated region
  $region14: #{model_fc_forward.1} parent=0 // pred_check
    _
  $region15: #{model_fc_forward.1} parent=0 // pred_check_branch
    %19 = sbr.rel (0) target = $region17
  $region16: #{model_fc_forward.1} parent=0 // pred_region
    _
  $region17: #{model_fc_forward.1} parent=0 // pred_fallthru
    _
  // Predicated region
  $region18: #{model_fc_forward.1} parent=0 // pred_check
    _
  $region19: #{model_fc_forward.1} parent=0 // pred_check_branch
    %21 = sbr.rel (0) target = $region21
  $region20: #{model_fc_forward.1} parent=0 // pred_region
    _
  $region21: #{model_fc_forward.1} parent=0 // pred_fallthru
    _
  // Predicated region
  $region22: #{model_fc_forward.1} parent=0 // pred_check
    _
  $region23: #{model_fc_forward.1} parent=0 // pred_check_branch
    %23 = sbr.rel (0) target = $region25
  $region24: #{model_fc_forward.1} parent=0 // pred_region
    _
  $region25: #{model_fc_forward.1} parent=0 // pred_fallthru
    _
  // Predicated region
  $region26: #{model_fc_forward.1} parent=0 // pred_check
    _
  $region27: #{model_fc_forward.1} parent=0 // pred_check_branch
    %25 = sbr.rel (0) target = $region29
  $region28: #{model_fc_forward.1} parent=0 // pred_region
    _
  $region29: #{model_fc_forward.1} parent=0 // pred_fallthru
    _
  %v27 = vld [vmem:[%s0] sm:$0xff]
  %v28 = vld [vmem:[%s0 + $0x8] sm:$0xff]
  %v29 = vld [vmem:[%s0 + $0x10] sm:$0xff]
  %v30 = vld [vmem:[%s0 + $0x18] sm:$0xff]
  %v31 = vld [vmem:[%s0 + $0x20] sm:$0xff]
  %v32 = vld [vmem:[%s0 + $0x28] sm:$0xff]
  %v33 = vld [vmem:[%s0 + $0x30] sm:$0xff]
  %v34 = vld [vmem:[%s0 + $0x38] sm:$0xff]
  %v35 = vld [vmem:[%s0 + $0x40] sm:$0xff]
  %v36 = vld [vmem:[%s0 + $0x48] sm:$0xff]
  %v37 = vld [vmem:[%s0 + $0x50] sm:$0xff]
  %v38 = vld [vmem:[%s0 + $0x58] sm:$0xff]
  %v39 = vld [vmem:[%s0 + $0x60] sm:$0xff]
  %v40 = vld [vmem:[%s0 + $0x68] sm:$0xff]
  %v41 = vld [vmem:[%s0 + $0x70] sm:$0xff]
  %v42 = vld [vmem:[%s0 + $0x78] sm:$0xff]
  %v43 = vld [vmem:[%s0 + $0x80] sm:$0xff]
  %v44 = vld [vmem:[%s0 + $0x88] sm:$0xff]
  %v45 = vld [vmem:[%s0 + $0x90] sm:$0xff]
  %v46 = vld [vmem:[%s0 + $0x98] sm:$0xff]
  %v47 = vld [vmem:[%s0 + $0xa0] sm:$0xff]
  %v48 = vld [vmem:[%s0 + $0xa8] sm:$0xff]
  %v49 = vld [vmem:[%s0 + $0xb0] sm:$0xff]
  %v50 = vld [vmem:[%s0 + $0xb8] sm:$0xff]
  %v51 = vld [vmem:[%s0 + $0xc0] sm:$0xff]
  %v52 = vld [vmem:[%s0 + $0xc8] sm:$0xff]
  %v53 = vld [vmem:[%s0 + $0xd0] sm:$0xff]
  %v54 = vld [vmem:[%s0 + $0xd8] sm:$0xff]
  %v55 = vld [vmem:[%s0 + $0xe0] sm:$0xff]
  %v56 = vld [vmem:[%s0 + $0xe8] sm:$0xff]
  %v57 = vld [vmem:[%s0 + $0xf0] sm:$0xff]
  %v58 = vld [vmem:[%s0 + $0xf8] sm:$0xff]
  %v59 = vpack.c.bf16 %v28, %v27
  %v60 = vpack.c.bf16 %v30, %v29
  %v61 = vpack.c.bf16 %v32, %v31
  %v62 = vpack.c.bf16 %v34, %v33
  %v63 = vpack.c.bf16 %v36, %v35
  %v64 = vpack.c.bf16 %v38, %v37
  %v65 = vpack.c.bf16 %v40, %v39
  %v66 = vpack.c.bf16 %v42, %v41
  %v67 = vpack.c.bf16 %v44, %v43
  %v68 = vpack.c.bf16 %v46, %v45
  %v69 = vpack.c.bf16 %v48, %v47
  %v70 = vpack.c.bf16 %v50, %v49
  %v71 = vpack.c.bf16 %v52, %v51
  %v72 = vpack.c.bf16 %v54, %v53
  %v73 = vpack.c.bf16 %v56, %v55
  %v74 = vpack.c.bf16 %v58, %v57
  %v75 = vld [vmem:[%s1] sm:$0xf]
  %v76 = vld [vmem:[%s1 + $0x4] sm:$0xf]
  %v77 = vld [vmem:[%s1 + $0x8] sm:$0xf]
  %v78 = vld [vmem:[%s1 + $0xc] sm:$0xf]
  %v79 = vld [vmem:[%s2] sm:$0x1]
  %v81 = vlaneseq
  %v82 = vshrl.u32 %v81, 7
  %v83 = vsub.s32 0, %v82
  %v84 = vrot.slane %v79, %v83
  %v90 = vunpack.c.l.b16 %v75
  %v91 = vunpack.c.l.b16 %v76
  %v92 = vunpack.c.l.b16 %v77
  %v93 = vunpack.c.l.b16 %v78
  %v94 = vpack.c.b16 %v91, %v90
  %v95 = vpack.c.b16 %v93, %v92
  %vm98 = vcmask 261120
  %v100 = vsel %vm98, %v59, 0
  %v103 = vsel %vm98, %v60, 0
  %v106 = vsel %vm98, %v61, 0
  %v109 = vsel %vm98, %v62, 0
  %v112 = vsel %vm98, %v63, 0
  %v115 = vsel %vm98, %v64, 0
  %v118 = vsel %vm98, %v65, 0
  %v121 = vsel %vm98, %v66, 0
  %v124 = vsel %vm98, %v67, 0
  %v127 = vsel %vm98, %v68, 0
  %v130 = vsel %vm98, %v69, 0
  %v133 = vsel %vm98, %v70, 0
  %v136 = vsel %vm98, %v71, 0
  %v139 = vsel %vm98, %v72, 0
  %v142 = vsel %vm98, %v73, 0
  %v145 = vsel %vm98, %v74, 0
  %147 = vmatprep.subr.bf16.mxu0 0
  %148 = vmatpush1.bf16.msra.mxu0 0
  %149 = vmatprep.subr.bf16.mxu0 0
  %150 = vmatpush1.bf16.msra.mxu0 0
  %151 = vmatprep.subr.bf16.mxu0 0
  %152 = vmatpush1.bf16.msra.mxu0 0
  %153 = vmatprep.subr.bf16.mxu0 0
  %154 = vmatpush1.bf16.msra.mxu0 0
  %155 = vmatprep.subr.bf16.mxu0 0
  %156 = vmatpush1.bf16.msra.mxu0 0
  %157 = vmatprep.subr.bf16.mxu0 0
  %158 = vmatpush1.bf16.msra.mxu0 0
  %159 = vmatprep.subr.bf16.mxu0 0
  %160 = vmatpush1.bf16.msra.mxu0 %v95
  %161 = vmatprep.subr.bf16.mxu0 0
  %162 = vmatpush1.bf16.msra.mxu0 %v94
  %163 = vmatprep.subr.bf16.mxu0 0
  %164 = vmatpush2.bf16.msra.mxu0 0
  %165 = vmatprep.subr.bf16.mxu0 0
  %166 = vmatpush2.bf16.msra.mxu0 0
  %167 = vmatprep.subr.bf16.mxu0 0
  %168 = vmatpush2.bf16.msra.mxu0 0
  %169 = vmatprep.subr.bf16.mxu0 0
  %170 = vmatpush2.bf16.msra.mxu0 0
  %171 = vmatprep.subr.bf16.mxu0 0
  %172 = vmatpush2.bf16.msra.mxu0 0
  %173 = vmatprep.subr.bf16.mxu0 0
  %174 = vmatpush2.bf16.msra.mxu0 0
  %175 = vmatprep.subr.bf16.mxu0 0
  %176 = vmatpush2.bf16.msra.mxu0 0
  %177 = vmatprep.subr.bf16.mxu0 0
  %178 = vmatpush2.bf16.msra.mxu0 0
  %179 = vmatprep.mubr.bf16.mxu0 0
  %180 = vmatmul.mubr.bf16.gmra.mxu0 %v100
  %v181 = vpop.f32.mrf.mxu0
  %v182 = vadd.f32 %v84, %v181
  %v183 = vpop.f32.mrf.mxu0
  %v184 = vpop.f32.mrf.mxu0
  %v185 = vadd.f32 %v84, %v184
  %v186 = vpop.f32.mrf.mxu0
  %187 = vmatprep.mubr.bf16.mxu0 0
  %188 = vmatmul.mubr.bf16.gmra.mxu0 %v103
  %v189 = vpop.f32.mrf.mxu0
  %v190 = vadd.f32 %v84, %v189
  %v191 = vpop.f32.mrf.mxu0
  %v192 = vpop.f32.mrf.mxu0
  %v193 = vadd.f32 %v84, %v192
  %v194 = vpop.f32.mrf.mxu0
  %195 = vmatprep.mubr.bf16.mxu0 0
  %196 = vmatmul.mubr.bf16.gmra.mxu0 %v106
  %v197 = vpop.f32.mrf.mxu0
  %v198 = vadd.f32 %v84, %v197
  %v199 = vpop.f32.mrf.mxu0
  %v200 = vpop.f32.mrf.mxu0
  %v201 = vadd.f32 %v84, %v200
  %v202 = vpop.f32.mrf.mxu0
  %203 = vmatprep.mubr.bf16.mxu0 0
  %204 = vmatmul.mubr.bf16.gmra.mxu0 %v109
  %v205 = vpop.f32.mrf.mxu0
  %v206 = vadd.f32 %v84, %v205
  %v207 = vpop.f32.mrf.mxu0
  %v208 = vpop.f32.mrf.mxu0
  %v209 = vadd.f32 %v84, %v208
  %v210 = vpop.f32.mrf.mxu0
  %211 = vmatprep.mubr.bf16.mxu0 0
  %212 = vmatmul.mubr.bf16.gmra.mxu0 %v112
  %v213 = vpop.f32.mrf.mxu0
  %v214 = vadd.f32 %v84, %v213
  %v215 = vpop.f32.mrf.mxu0
  %v216 = vpop.f32.mrf.mxu0
  %v217 = vadd.f32 %v84, %v216
  %v218 = vpop.f32.mrf.mxu0
  %219 = vmatprep.mubr.bf16.mxu0 0
  %220 = vmatmul.mubr.bf16.gmra.mxu0 %v115
  %v221 = vpop.f32.mrf.mxu0
  %v222 = vadd.f32 %v84, %v221
  %v223 = vpop.f32.mrf.mxu0
  %v224 = vpop.f32.mrf.mxu0
  %v225 = vadd.f32 %v84, %v224
  %v226 = vpop.f32.mrf.mxu0
  %227 = vmatprep.mubr.bf16.mxu0 0
  %228 = vmatmul.mubr.bf16.gmra.mxu0 %v118
  %v229 = vpop.f32.mrf.mxu0
  %v230 = vadd.f32 %v84, %v229
  %v231 = vpop.f32.mrf.mxu0
  %v232 = vpop.f32.mrf.mxu0
  %v233 = vadd.f32 %v84, %v232
  %v234 = vpop.f32.mrf.mxu0
  %235 = vmatprep.mubr.bf16.mxu0 0
  %236 = vmatmul.mubr.bf16.gmra.mxu0 %v121
  %v237 = vpop.f32.mrf.mxu0
  %v238 = vadd.f32 %v84, %v237
  %v239 = vpop.f32.mrf.mxu0
  %v240 = vpop.f32.mrf.mxu0
  %v241 = vadd.f32 %v84, %v240
  %v242 = vpop.f32.mrf.mxu0
  %243 = vmatprep.mubr.bf16.mxu0 0
  %244 = vmatmul.mubr.bf16.gmra.mxu0 %v124
  %v245 = vpop.f32.mrf.mxu0
  %v246 = vadd.f32 %v84, %v245
  %v247 = vpop.f32.mrf.mxu0
  %v248 = vpop.f32.mrf.mxu0
  %v249 = vadd.f32 %v84, %v248
  %v250 = vpop.f32.mrf.mxu0
  %251 = vmatprep.mubr.bf16.mxu0 0
  %252 = vmatmul.mubr.bf16.gmra.mxu0 %v127
  %v253 = vpop.f32.mrf.mxu0
  %v254 = vadd.f32 %v84, %v253
  %v255 = vpop.f32.mrf.mxu0
  %v256 = vpop.f32.mrf.mxu0
  %v257 = vadd.f32 %v84, %v256
  %v258 = vpop.f32.mrf.mxu0
  %259 = vmatprep.mubr.bf16.mxu0 0
  %260 = vmatmul.mubr.bf16.gmra.mxu0 %v130
  %v261 = vpop.f32.mrf.mxu0
  %v262 = vadd.f32 %v84, %v261
  %v263 = vpop.f32.mrf.mxu0
  %v264 = vpop.f32.mrf.mxu0
  %v265 = vadd.f32 %v84, %v264
  %v266 = vpop.f32.mrf.mxu0
  %267 = vmatprep.mubr.bf16.mxu0 0
  %268 = vmatmul.mubr.bf16.gmra.mxu0 %v133
  %v269 = vpop.f32.mrf.mxu0
  %v270 = vadd.f32 %v84, %v269
  %v271 = vpop.f32.mrf.mxu0
  %v272 = vpop.f32.mrf.mxu0
  %v273 = vadd.f32 %v84, %v272
  %v274 = vpop.f32.mrf.mxu0
  %275 = vmatprep.mubr.bf16.mxu0 0
  %276 = vmatmul.mubr.bf16.gmra.mxu0 %v136
  %v277 = vpop.f32.mrf.mxu0
  %v278 = vadd.f32 %v84, %v277
  %v279 = vpop.f32.mrf.mxu0
  %v280 = vpop.f32.mrf.mxu0
  %v281 = vadd.f32 %v84, %v280
  %v282 = vpop.f32.mrf.mxu0
  %283 = vmatprep.mubr.bf16.mxu0 0
  %284 = vmatmul.mubr.bf16.gmra.mxu0 %v139
  %v285 = vpop.f32.mrf.mxu0
  %v286 = vadd.f32 %v84, %v285
  %v287 = vpop.f32.mrf.mxu0
  %v288 = vpop.f32.mrf.mxu0
  %v289 = vadd.f32 %v84, %v288
  %v290 = vpop.f32.mrf.mxu0
  %291 = vmatprep.mubr.bf16.mxu0 0
  %292 = vmatmul.mubr.bf16.gmra.mxu0 %v142
  %v293 = vpop.f32.mrf.mxu0
  %v294 = vadd.f32 %v84, %v293
  %v295 = vpop.f32.mrf.mxu0
  %v296 = vpop.f32.mrf.mxu0
  %v297 = vadd.f32 %v84, %v296
  %v298 = vpop.f32.mrf.mxu0
  %299 = vmatprep.mubr.bf16.mxu0 0
  %300 = vmatmul.mubr.bf16.gmra.mxu0 %v145
  %v301 = vpop.f32.mrf.mxu0
  %v302 = vadd.f32 %v84, %v301
  %v303 = vpop.f32.mrf.mxu0
  %v304 = vpop.f32.mrf.mxu0
  %v305 = vadd.f32 %v84, %v304
  %v306 = vpop.f32.mrf.mxu0
  %307 = vdwg.mxu0
  %v308 = vmax.f32 %v182, 0.0
  %v309 = vmax.f32 %v185, 0.0
  %v310 = vmax.f32 %v190, 0.0
  %v311 = vmax.f32 %v193, 0.0
  %v312 = vmax.f32 %v198, 0.0
  %v313 = vmax.f32 %v201, 0.0
  %v314 = vmax.f32 %v206, 0.0
  %v315 = vmax.f32 %v209, 0.0
  %v316 = vmax.f32 %v214, 0.0
  %v317 = vmax.f32 %v217, 0.0
  %v318 = vmax.f32 %v222, 0.0
  %v319 = vmax.f32 %v225, 0.0
  %v320 = vmax.f32 %v230, 0.0
  %v321 = vmax.f32 %v233, 0.0
  %v322 = vmax.f32 %v238, 0.0
  %v323 = vmax.f32 %v241, 0.0
  %v324 = vmax.f32 %v246, 0.0
  %v325 = vmax.f32 %v249, 0.0
  %v326 = vmax.f32 %v254, 0.0
  %v327 = vmax.f32 %v257, 0.0
  %v328 = vmax.f32 %v262, 0.0
  %v329 = vmax.f32 %v265, 0.0
  %v330 = vmax.f32 %v270, 0.0
  %v331 = vmax.f32 %v273, 0.0
  %v332 = vmax.f32 %v278, 0.0
  %v333 = vmax.f32 %v281, 0.0
  %v334 = vmax.f32 %v286, 0.0
  %v335 = vmax.f32 %v289, 0.0
  %v336 = vmax.f32 %v294, 0.0
  %v337 = vmax.f32 %v297, 0.0
  %v338 = vmax.f32 %v302, 0.0
  %v339 = vmax.f32 %v305, 0.0
  %v340 = vpack.c.bf16 %v309, %v308
  %v341 = vpack.c.bf16 %v311, %v310
  %v342 = vpack.c.bf16 %v313, %v312
  %v343 = vpack.c.bf16 %v315, %v314
  %v344 = vpack.c.bf16 %v317, %v316
  %v345 = vpack.c.bf16 %v319, %v318
  %v346 = vpack.c.bf16 %v321, %v320
  %v347 = vpack.c.bf16 %v323, %v322
  %v348 = vpack.c.bf16 %v325, %v324
  %v349 = vpack.c.bf16 %v327, %v326
  %v350 = vpack.c.bf16 %v329, %v328
  %v351 = vpack.c.bf16 %v331, %v330
  %v352 = vpack.c.bf16 %v333, %v332
  %v353 = vpack.c.bf16 %v335, %v334
  %v354 = vpack.c.bf16 %v337, %v336
  %v355 = vpack.c.bf16 %v339, %v338
  %v356 = vld [vmem:[%s3] sm:$0xf]
  %v357 = vld [vmem:[%s3 + $0x4] sm:$0xf]
  %v358 = vld [vmem:[%s3 + $0x8] sm:$0xf]
  %v359 = vld [vmem:[%s3 + $0xc] sm:$0xf]
  %v360 = vld [vmem:[%s3 + $0x10] sm:$0xf]
  %v361 = vld [vmem:[%s3 + $0x14] sm:$0xf]
  %v362 = vld [vmem:[%s3 + $0x18] sm:$0xf]
  %v363 = vld [vmem:[%s3 + $0x1c] sm:$0xf]
  %v364 = vld [vmem:[%s3 + $0x20] sm:$0xf]
  %v365 = vld [vmem:[%s3 + $0x24] sm:$0xf]
  %v366 = vld [vmem:[%s3 + $0x28] sm:$0xf]
  %v367 = vld [vmem:[%s3 + $0x2c] sm:$0xf]
  %v368 = vld [vmem:[%s3 + $0x30] sm:$0xf]
  %v369 = vld [vmem:[%s3 + $0x34] sm:$0xf]
  %v370 = vld [vmem:[%s3 + $0x38] sm:$0xf]
  %v371 = vld [vmem:[%s3 + $0x3c] sm:$0xf]
  %v372 = vld [vmem:[%s4] sm:$0x1]
  %v374 = vlaneseq
  %v375 = vshrl.u32 %v374, 7
  %v376 = vsub.s32 0, %v375
  %v377 = vrot.slane %v372, %v376
  %v395 = vunpack.c.l.b16 %v356
  %v396 = vunpack.c.l.b16 %v357
  %v397 = vunpack.c.l.b16 %v358
  %v398 = vunpack.c.l.b16 %v359
  %v399 = vunpack.c.l.b16 %v360
  %v400 = vunpack.c.l.b16 %v361
  %v401 = vunpack.c.l.b16 %v362
  %v402 = vunpack.c.l.b16 %v363
  %v403 = vunpack.c.l.b16 %v364
  %v404 = vunpack.c.l.b16 %v365
  %v405 = vunpack.c.l.b16 %v366
  %v406 = vunpack.c.l.b16 %v367
  %v407 = vunpack.c.l.b16 %v368
  %v408 = vunpack.c.l.b16 %v369
  %v409 = vunpack.c.l.b16 %v370
  %v410 = vunpack.c.l.b16 %v371
  %v411 = vpack.c.b16 %v396, %v395
  %v412 = vpack.c.b16 %v398, %v397
  %v413 = vpack.c.b16 %v400, %v399
  %v414 = vpack.c.b16 %v402, %v401
  %v415 = vpack.c.b16 %v404, %v403
  %v416 = vpack.c.b16 %v406, %v405
  %v417 = vpack.c.b16 %v408, %v407
  %v418 = vpack.c.b16 %v410, %v409
  %427 = vmatprep.subr.bf16.mxu0 0
  %428 = vmatpush1.bf16.msra.mxu0 %v418
  %429 = vmatprep.subr.bf16.mxu0 0
  %430 = vmatpush1.bf16.msra.mxu0 %v417
  %431 = vmatprep.subr.bf16.mxu0 0
  %432 = vmatpush1.bf16.msra.mxu0 %v416
  %433 = vmatprep.subr.bf16.mxu0 0
  %434 = vmatpush1.bf16.msra.mxu0 %v415
  %435 = vmatprep.subr.bf16.mxu0 0
  %436 = vmatpush1.bf16.msra.mxu0 %v414
  %437 = vmatprep.subr.bf16.mxu0 0
  %438 = vmatpush1.bf16.msra.mxu0 %v413
  %439 = vmatprep.subr.bf16.mxu0 0
  %440 = vmatpush1.bf16.msra.mxu0 %v412
  %441 = vmatprep.subr.bf16.mxu0 0
  %442 = vmatpush1.bf16.msra.mxu0 %v411
  %443 = vmatprep.subr.bf16.mxu0 0
  %444 = vmatpush2.bf16.msra.mxu0 0
  %445 = vmatprep.subr.bf16.mxu0 0
  %446 = vmatpush2.bf16.msra.mxu0 0
  %447 = vmatprep.subr.bf16.mxu0 0
  %448 = vmatpush2.bf16.msra.mxu0 0
  %449 = vmatprep.subr.bf16.mxu0 0
  %450 = vmatpush2.bf16.msra.mxu0 0
  %451 = vmatprep.subr.bf16.mxu0 0
  %452 = vmatpush2.bf16.msra.mxu0 0
  %453 = vmatprep.subr.bf16.mxu0 0
  %454 = vmatpush2.bf16.msra.mxu0 0
  %455 = vmatprep.subr.bf16.mxu0 0
  %456 = vmatpush2.bf16.msra.mxu0 0
  %457 = vmatprep.subr.bf16.mxu0 0
  %458 = vmatpush2.bf16.msra.mxu0 0
  %459 = vmatprep.mubr.bf16.mxu0 0
  %460 = vmatmul.mubr.bf16.gmra.mxu0 %v340
  %v461 = vpop.f32.mrf.mxu0
  %v462 = vadd.f32 %v377, %v461
  %v463 = vpop.f32.mrf.mxu0
  %v464 = vpop.f32.mrf.mxu0
  %v465 = vadd.f32 %v377, %v464
  %v466 = vpop.f32.mrf.mxu0
  %467 = vmatprep.mubr.bf16.mxu0 0
  %468 = vmatmul.mubr.bf16.gmra.mxu0 %v341
  %v469 = vpop.f32.mrf.mxu0
  %v470 = vadd.f32 %v377, %v469
  %v471 = vpop.f32.mrf.mxu0
  %v472 = vpop.f32.mrf.mxu0
  %v473 = vadd.f32 %v377, %v472
  %v474 = vpop.f32.mrf.mxu0
  %475 = vmatprep.mubr.bf16.mxu0 0
  %476 = vmatmul.mubr.bf16.gmra.mxu0 %v342
  %v477 = vpop.f32.mrf.mxu0
  %v478 = vadd.f32 %v377, %v477
  %v479 = vpop.f32.mrf.mxu0
  %v480 = vpop.f32.mrf.mxu0
  %v481 = vadd.f32 %v377, %v480
  %v482 = vpop.f32.mrf.mxu0
  %483 = vmatprep.mubr.bf16.mxu0 0
  %484 = vmatmul.mubr.bf16.gmra.mxu0 %v343
  %v485 = vpop.f32.mrf.mxu0
  %v486 = vadd.f32 %v377, %v485
  %v487 = vpop.f32.mrf.mxu0
  %v488 = vpop.f32.mrf.mxu0
  %v489 = vadd.f32 %v377, %v488
  %v490 = vpop.f32.mrf.mxu0
  %491 = vmatprep.mubr.bf16.mxu0 0
  %492 = vmatmul.mubr.bf16.gmra.mxu0 %v344
  %v493 = vpop.f32.mrf.mxu0
  %v494 = vadd.f32 %v377, %v493
  %v495 = vpop.f32.mrf.mxu0
  %v496 = vpop.f32.mrf.mxu0
  %v497 = vadd.f32 %v377, %v496
  %v498 = vpop.f32.mrf.mxu0
  %499 = vmatprep.mubr.bf16.mxu0 0
  %500 = vmatmul.mubr.bf16.gmra.mxu0 %v345
  %v501 = vpop.f32.mrf.mxu0
  %v502 = vadd.f32 %v377, %v501
  %v503 = vpop.f32.mrf.mxu0
  %v504 = vpop.f32.mrf.mxu0
  %v505 = vadd.f32 %v377, %v504
  %v506 = vpop.f32.mrf.mxu0
  %507 = vmatprep.mubr.bf16.mxu0 0
  %508 = vmatmul.mubr.bf16.gmra.mxu0 %v346
  %v509 = vpop.f32.mrf.mxu0
  %v510 = vadd.f32 %v377, %v509
  %v511 = vpop.f32.mrf.mxu0
  %v512 = vpop.f32.mrf.mxu0
  %v513 = vadd.f32 %v377, %v512
  %v514 = vpop.f32.mrf.mxu0
  %515 = vmatprep.mubr.bf16.mxu0 0
  %516 = vmatmul.mubr.bf16.gmra.mxu0 %v347
  %v517 = vpop.f32.mrf.mxu0
  %v518 = vadd.f32 %v377, %v517
  %v519 = vpop.f32.mrf.mxu0
  %v520 = vpop.f32.mrf.mxu0
  %v521 = vadd.f32 %v377, %v520
  %v522 = vpop.f32.mrf.mxu0
  %523 = vmatprep.mubr.bf16.mxu0 0
  %524 = vmatmul.mubr.bf16.gmra.mxu0 %v348
  %v525 = vpop.f32.mrf.mxu0
  %v526 = vadd.f32 %v377, %v525
  %v527 = vpop.f32.mrf.mxu0
  %v528 = vpop.f32.mrf.mxu0
  %v529 = vadd.f32 %v377, %v528
  %v530 = vpop.f32.mrf.mxu0
  %531 = vmatprep.mubr.bf16.mxu0 0
  %532 = vmatmul.mubr.bf16.gmra.mxu0 %v349
  %v533 = vpop.f32.mrf.mxu0
  %v534 = vadd.f32 %v377, %v533
  %v535 = vpop.f32.mrf.mxu0
  %v536 = vpop.f32.mrf.mxu0
  %v537 = vadd.f32 %v377, %v536
  %v538 = vpop.f32.mrf.mxu0
  %539 = vmatprep.mubr.bf16.mxu0 0
  %540 = vmatmul.mubr.bf16.gmra.mxu0 %v350
  %v541 = vpop.f32.mrf.mxu0
  %v542 = vadd.f32 %v377, %v541
  %v543 = vpop.f32.mrf.mxu0
  %v544 = vpop.f32.mrf.mxu0
  %v545 = vadd.f32 %v377, %v544
  %v546 = vpop.f32.mrf.mxu0
  %547 = vmatprep.mubr.bf16.mxu0 0
  %548 = vmatmul.mubr.bf16.gmra.mxu0 %v351
  %v549 = vpop.f32.mrf.mxu0
  %v550 = vadd.f32 %v377, %v549
  %v551 = vpop.f32.mrf.mxu0
  %v552 = vpop.f32.mrf.mxu0
  %v553 = vadd.f32 %v377, %v552
  %v554 = vpop.f32.mrf.mxu0
  %555 = vmatprep.mubr.bf16.mxu0 0
  %556 = vmatmul.mubr.bf16.gmra.mxu0 %v352
  %v557 = vpop.f32.mrf.mxu0
  %v558 = vadd.f32 %v377, %v557
  %v559 = vpop.f32.mrf.mxu0
  %v560 = vpop.f32.mrf.mxu0
  %v561 = vadd.f32 %v377, %v560
  %v562 = vpop.f32.mrf.mxu0
  %563 = vmatprep.mubr.bf16.mxu0 0
  %564 = vmatmul.mubr.bf16.gmra.mxu0 %v353
  %v565 = vpop.f32.mrf.mxu0
  %v566 = vadd.f32 %v377, %v565
  %v567 = vpop.f32.mrf.mxu0
  %v568 = vpop.f32.mrf.mxu0
  %v569 = vadd.f32 %v377, %v568
  %v570 = vpop.f32.mrf.mxu0
  %571 = vmatprep.mubr.bf16.mxu0 0
  %572 = vmatmul.mubr.bf16.gmra.mxu0 %v354
  %v573 = vpop.f32.mrf.mxu0
  %v574 = vadd.f32 %v377, %v573
  %v575 = vpop.f32.mrf.mxu0
  %v576 = vpop.f32.mrf.mxu0
  %v577 = vadd.f32 %v377, %v576
  %v578 = vpop.f32.mrf.mxu0
  %579 = vmatprep.mubr.bf16.mxu0 0
  %580 = vmatmul.mubr.bf16.gmra.mxu0 %v355
  %v581 = vpop.f32.mrf.mxu0
  %v582 = vadd.f32 %v377, %v581
  %v583 = vpop.f32.mrf.mxu0
  %v584 = vpop.f32.mrf.mxu0
  %v585 = vadd.f32 %v377, %v584
  %v586 = vpop.f32.mrf.mxu0
  %587 = vdwg.mxu0
  %v588 = vmax.f32 %v462, 0.0
  %v589 = vmax.f32 %v465, 0.0
  %v590 = vmax.f32 %v470, 0.0
  %v591 = vmax.f32 %v473, 0.0
  %v592 = vmax.f32 %v478, 0.0
  %v593 = vmax.f32 %v481, 0.0
  %v594 = vmax.f32 %v486, 0.0
  %v595 = vmax.f32 %v489, 0.0
  %v596 = vmax.f32 %v494, 0.0
  %v597 = vmax.f32 %v497, 0.0
  %v598 = vmax.f32 %v502, 0.0
  %v599 = vmax.f32 %v505, 0.0
  %v600 = vmax.f32 %v510, 0.0
  %v601 = vmax.f32 %v513, 0.0
  %v602 = vmax.f32 %v518, 0.0
  %v603 = vmax.f32 %v521, 0.0
  %v604 = vmax.f32 %v526, 0.0
  %v605 = vmax.f32 %v529, 0.0
  %v606 = vmax.f32 %v534, 0.0
  %v607 = vmax.f32 %v537, 0.0
  %v608 = vmax.f32 %v542, 0.0
  %v609 = vmax.f32 %v545, 0.0
  %v610 = vmax.f32 %v550, 0.0
  %v611 = vmax.f32 %v553, 0.0
  %v612 = vmax.f32 %v558, 0.0
  %v613 = vmax.f32 %v561, 0.0
  %v614 = vmax.f32 %v566, 0.0
  %v615 = vmax.f32 %v569, 0.0
  %v616 = vmax.f32 %v574, 0.0
  %v617 = vmax.f32 %v577, 0.0
  %v618 = vmax.f32 %v582, 0.0
  %v619 = vmax.f32 %v585, 0.0
  %v620 = vpack.c.bf16 %v589, %v588
  %v621 = vpack.c.bf16 %v591, %v590
  %v622 = vpack.c.bf16 %v593, %v592
  %v623 = vpack.c.bf16 %v595, %v594
  %v624 = vpack.c.bf16 %v597, %v596
  %v625 = vpack.c.bf16 %v599, %v598
  %v626 = vpack.c.bf16 %v601, %v600
  %v627 = vpack.c.bf16 %v603, %v602
  %v628 = vpack.c.bf16 %v605, %v604
  %v629 = vpack.c.bf16 %v607, %v606
  %v630 = vpack.c.bf16 %v609, %v608
  %v631 = vpack.c.bf16 %v611, %v610
  %v632 = vpack.c.bf16 %v613, %v612
  %v633 = vpack.c.bf16 %v615, %v614
  %v634 = vpack.c.bf16 %v617, %v616
  %v635 = vpack.c.bf16 %v619, %v618
  %v636 = vld [vmem:[%s5] sm:$0xf]
  %v637 = vld [vmem:[%s5 + $0x4] sm:$0xf]
  %v638 = vld [vmem:[%s5 + $0x8] sm:$0xf]
  %v639 = vld [vmem:[%s5 + $0xc] sm:$0xf]
  %v640 = vld [vmem:[%s5 + $0x10] sm:$0xf]
  %v641 = vld [vmem:[%s5 + $0x14] sm:$0xf]
  %v642 = vld [vmem:[%s5 + $0x18] sm:$0xf]
  %v643 = vld [vmem:[%s5 + $0x1c] sm:$0xf]
  %v644 = vld [vmem:[%s5 + $0x20] sm:$0xf]
  %v645 = vld [vmem:[%s5 + $0x24] sm:$0xf]
  %v646 = vld [vmem:[%s5 + $0x28] sm:$0xf]
  %v647 = vld [vmem:[%s5 + $0x2c] sm:$0xf]
  %v648 = vld [vmem:[%s5 + $0x30] sm:$0xf]
  %v649 = vld [vmem:[%s5 + $0x34] sm:$0xf]
  %v650 = vld [vmem:[%s5 + $0x38] sm:$0xf]
  %v651 = vld [vmem:[%s5 + $0x3c] sm:$0xf]
  %v652 = vld [vmem:[%s6] sm:$0x1]
  %v654 = vlaneseq
  %v655 = vshrl.u32 %v654, 7
  %v656 = vsub.s32 0, %v655
  %v657 = vrot.slane %v652, %v656
  %v675 = vunpack.c.l.b16 %v636
  %v676 = vunpack.c.l.b16 %v637
  %v677 = vunpack.c.l.b16 %v638
  %v678 = vunpack.c.l.b16 %v639
  %v679 = vunpack.c.l.b16 %v640
  %v680 = vunpack.c.l.b16 %v641
  %v681 = vunpack.c.l.b16 %v642
  %v682 = vunpack.c.l.b16 %v643
  %v683 = vunpack.c.l.b16 %v644
  %v684 = vunpack.c.l.b16 %v645
  %v685 = vunpack.c.l.b16 %v646
  %v686 = vunpack.c.l.b16 %v647
  %v687 = vunpack.c.l.b16 %v648
  %v688 = vunpack.c.l.b16 %v649
  %v689 = vunpack.c.l.b16 %v650
  %v690 = vunpack.c.l.b16 %v651
  %v691 = vpack.c.b16 %v676, %v675
  %v692 = vpack.c.b16 %v678, %v677
  %v693 = vpack.c.b16 %v680, %v679
  %v694 = vpack.c.b16 %v682, %v681
  %v695 = vpack.c.b16 %v684, %v683
  %v696 = vpack.c.b16 %v686, %v685
  %v697 = vpack.c.b16 %v688, %v687
  %v698 = vpack.c.b16 %v690, %v689
  %707 = vmatprep.subr.bf16.mxu0 0
  %708 = vmatpush1.bf16.msra.mxu0 %v698
  %709 = vmatprep.subr.bf16.mxu0 0
  %710 = vmatpush1.bf16.msra.mxu0 %v697
  %711 = vmatprep.subr.bf16.mxu0 0
  %712 = vmatpush1.bf16.msra.mxu0 %v696
  %713 = vmatprep.subr.bf16.mxu0 0
  %714 = vmatpush1.bf16.msra.mxu0 %v695
  %715 = vmatprep.subr.bf16.mxu0 0
  %716 = vmatpush1.bf16.msra.mxu0 %v694
  %717 = vmatprep.subr.bf16.mxu0 0
  %718 = vmatpush1.bf16.msra.mxu0 %v693
  %719 = vmatprep.subr.bf16.mxu0 0
  %720 = vmatpush1.bf16.msra.mxu0 %v692
  %721 = vmatprep.subr.bf16.mxu0 0
  %722 = vmatpush1.bf16.msra.mxu0 %v691
  %723 = vmatprep.subr.bf16.mxu0 0
  %724 = vmatpush2.bf16.msra.mxu0 0
  %725 = vmatprep.subr.bf16.mxu0 0
  %726 = vmatpush2.bf16.msra.mxu0 0
  %727 = vmatprep.subr.bf16.mxu0 0
  %728 = vmatpush2.bf16.msra.mxu0 0
  %729 = vmatprep.subr.bf16.mxu0 0
  %730 = vmatpush2.bf16.msra.mxu0 0
  %731 = vmatprep.subr.bf16.mxu0 0
  %732 = vmatpush2.bf16.msra.mxu0 0
  %733 = vmatprep.subr.bf16.mxu0 0
  %734 = vmatpush2.bf16.msra.mxu0 0
  %735 = vmatprep.subr.bf16.mxu0 0
  %736 = vmatpush2.bf16.msra.mxu0 0
  %737 = vmatprep.subr.bf16.mxu0 0
  %738 = vmatpush2.bf16.msra.mxu0 0
  %739 = vmatprep.mubr.bf16.mxu0 0
  %740 = vmatmul.mubr.bf16.gmra.mxu0 %v620
  %v741 = vpop.f32.mrf.mxu0
  %v742 = vadd.f32 %v657, %v741
  %v743 = vpop.f32.mrf.mxu0
  %v744 = vpop.f32.mrf.mxu0
  %v745 = vadd.f32 %v657, %v744
  %v746 = vpop.f32.mrf.mxu0
  %747 = vmatprep.mubr.bf16.mxu0 0
  %748 = vmatmul.mubr.bf16.gmra.mxu0 %v621
  %v749 = vpop.f32.mrf.mxu0
  %v750 = vadd.f32 %v657, %v749
  %v751 = vpop.f32.mrf.mxu0
  %v752 = vpop.f32.mrf.mxu0
  %v753 = vadd.f32 %v657, %v752
  %v754 = vpop.f32.mrf.mxu0
  %755 = vmatprep.mubr.bf16.mxu0 0
  %756 = vmatmul.mubr.bf16.gmra.mxu0 %v622
  %v757 = vpop.f32.mrf.mxu0
  %v758 = vadd.f32 %v657, %v757
  %v759 = vpop.f32.mrf.mxu0
  %v760 = vpop.f32.mrf.mxu0
  %v761 = vadd.f32 %v657, %v760
  %v762 = vpop.f32.mrf.mxu0
  %763 = vmatprep.mubr.bf16.mxu0 0
  %764 = vmatmul.mubr.bf16.gmra.mxu0 %v623
  %v765 = vpop.f32.mrf.mxu0
  %v766 = vadd.f32 %v657, %v765
  %v767 = vpop.f32.mrf.mxu0
  %v768 = vpop.f32.mrf.mxu0
  %v769 = vadd.f32 %v657, %v768
  %v770 = vpop.f32.mrf.mxu0
  %771 = vmatprep.mubr.bf16.mxu0 0
  %772 = vmatmul.mubr.bf16.gmra.mxu0 %v624
  %v773 = vpop.f32.mrf.mxu0
  %v774 = vadd.f32 %v657, %v773
  %v775 = vpop.f32.mrf.mxu0
  %v776 = vpop.f32.mrf.mxu0
  %v777 = vadd.f32 %v657, %v776
  %v778 = vpop.f32.mrf.mxu0
  %779 = vmatprep.mubr.bf16.mxu0 0
  %780 = vmatmul.mubr.bf16.gmra.mxu0 %v625
  %v781 = vpop.f32.mrf.mxu0
  %v782 = vadd.f32 %v657, %v781
  %v783 = vpop.f32.mrf.mxu0
  %v784 = vpop.f32.mrf.mxu0
  %v785 = vadd.f32 %v657, %v784
  %v786 = vpop.f32.mrf.mxu0
  %787 = vmatprep.mubr.bf16.mxu0 0
  %788 = vmatmul.mubr.bf16.gmra.mxu0 %v626
  %v789 = vpop.f32.mrf.mxu0
  %v790 = vadd.f32 %v657, %v789
  %v791 = vpop.f32.mrf.mxu0
  %v792 = vpop.f32.mrf.mxu0
  %v793 = vadd.f32 %v657, %v792
  %v794 = vpop.f32.mrf.mxu0
  %795 = vmatprep.mubr.bf16.mxu0 0
  %796 = vmatmul.mubr.bf16.gmra.mxu0 %v627
  %v797 = vpop.f32.mrf.mxu0
  %v798 = vadd.f32 %v657, %v797
  %v799 = vpop.f32.mrf.mxu0
  %v800 = vpop.f32.mrf.mxu0
  %v801 = vadd.f32 %v657, %v800
  %v802 = vpop.f32.mrf.mxu0
  %803 = vmatprep.mubr.bf16.mxu0 0
  %804 = vmatmul.mubr.bf16.gmra.mxu0 %v628
  %v805 = vpop.f32.mrf.mxu0
  %v806 = vadd.f32 %v657, %v805
  %v807 = vpop.f32.mrf.mxu0
  %v808 = vpop.f32.mrf.mxu0
  %v809 = vadd.f32 %v657, %v808
  %v810 = vpop.f32.mrf.mxu0
  %811 = vmatprep.mubr.bf16.mxu0 0
  %812 = vmatmul.mubr.bf16.gmra.mxu0 %v629
  %v813 = vpop.f32.mrf.mxu0
  %v814 = vadd.f32 %v657, %v813
  %v815 = vpop.f32.mrf.mxu0
  %v816 = vpop.f32.mrf.mxu0
  %v817 = vadd.f32 %v657, %v816
  %v818 = vpop.f32.mrf.mxu0
  %819 = vmatprep.mubr.bf16.mxu0 0
  %820 = vmatmul.mubr.bf16.gmra.mxu0 %v630
  %v821 = vpop.f32.mrf.mxu0
  %v822 = vadd.f32 %v657, %v821
  %v823 = vpop.f32.mrf.mxu0
  %v824 = vpop.f32.mrf.mxu0
  %v825 = vadd.f32 %v657, %v824
  %v826 = vpop.f32.mrf.mxu0
  %827 = vmatprep.mubr.bf16.mxu0 0
  %828 = vmatmul.mubr.bf16.gmra.mxu0 %v631
  %v829 = vpop.f32.mrf.mxu0
  %v830 = vadd.f32 %v657, %v829
  %v831 = vpop.f32.mrf.mxu0
  %v832 = vpop.f32.mrf.mxu0
  %v833 = vadd.f32 %v657, %v832
  %v834 = vpop.f32.mrf.mxu0
  %835 = vmatprep.mubr.bf16.mxu0 0
  %836 = vmatmul.mubr.bf16.gmra.mxu0 %v632
  %v837 = vpop.f32.mrf.mxu0
  %v838 = vadd.f32 %v657, %v837
  %v839 = vpop.f32.mrf.mxu0
  %v840 = vpop.f32.mrf.mxu0
  %v841 = vadd.f32 %v657, %v840
  %v842 = vpop.f32.mrf.mxu0
  %843 = vmatprep.mubr.bf16.mxu0 0
  %844 = vmatmul.mubr.bf16.gmra.mxu0 %v633
  %v845 = vpop.f32.mrf.mxu0
  %v846 = vadd.f32 %v657, %v845
  %v847 = vpop.f32.mrf.mxu0
  %v848 = vpop.f32.mrf.mxu0
  %v849 = vadd.f32 %v657, %v848
  %v850 = vpop.f32.mrf.mxu0
  %851 = vmatprep.mubr.bf16.mxu0 0
  %852 = vmatmul.mubr.bf16.gmra.mxu0 %v634
  %v853 = vpop.f32.mrf.mxu0
  %v854 = vadd.f32 %v657, %v853
  %v855 = vpop.f32.mrf.mxu0
  %v856 = vpop.f32.mrf.mxu0
  %v857 = vadd.f32 %v657, %v856
  %v858 = vpop.f32.mrf.mxu0
  %859 = vmatprep.mubr.bf16.mxu0 0
  %860 = vmatmul.mubr.bf16.gmra.mxu0 %v635
  %v861 = vpop.f32.mrf.mxu0
  %v862 = vadd.f32 %v657, %v861
  %v863 = vpop.f32.mrf.mxu0
  %v864 = vpop.f32.mrf.mxu0
  %v865 = vadd.f32 %v657, %v864
  %v866 = vpop.f32.mrf.mxu0
  %867 = vdwg.mxu0
  %v868 = vxor.u32 %v742, 2147483648
  %v869 = vxor.u32 %v745, 2147483648
  %v870 = vxor.u32 %v750, 2147483648
  %v871 = vxor.u32 %v753, 2147483648
  %v872 = vxor.u32 %v758, 2147483648
  %v873 = vxor.u32 %v761, 2147483648
  %v874 = vxor.u32 %v766, 2147483648
  %v875 = vxor.u32 %v769, 2147483648
  %v876 = vxor.u32 %v774, 2147483648
  %v877 = vxor.u32 %v777, 2147483648
  %v878 = vxor.u32 %v782, 2147483648
  %v879 = vxor.u32 %v785, 2147483648
  %v880 = vxor.u32 %v790, 2147483648
  %v881 = vxor.u32 %v793, 2147483648
  %v882 = vxor.u32 %v798, 2147483648
  %v883 = vxor.u32 %v801, 2147483648
  %v884 = vxor.u32 %v806, 2147483648
  %v885 = vxor.u32 %v809, 2147483648
  %v886 = vxor.u32 %v814, 2147483648
  %v887 = vxor.u32 %v817, 2147483648
  %v888 = vxor.u32 %v822, 2147483648
  %v889 = vxor.u32 %v825, 2147483648
  %v890 = vxor.u32 %v830, 2147483648
  %v891 = vxor.u32 %v833, 2147483648
  %v892 = vxor.u32 %v838, 2147483648
  %v893 = vxor.u32 %v841, 2147483648
  %v894 = vxor.u32 %v846, 2147483648
  %v895 = vxor.u32 %v849, 2147483648
  %v896 = vxor.u32 %v854, 2147483648
  %v897 = vxor.u32 %v857, 2147483648
  %v898 = vxor.u32 %v862, 2147483648
  %v899 = vxor.u32 %v865, 2147483648
  %v900 = vmul.f32 %v868, 1.442695
  %v901 = vpow.pop %v900
  %v902 = vmul.f32 %v869, 1.442695
  %v903 = vpow.pop %v902
  %v904 = vmul.f32 %v870, 1.442695
  %v905 = vpow.pop %v904
  %v906 = vmul.f32 %v871, 1.442695
  %v907 = vpow.pop %v906
  %v908 = vmul.f32 %v872, 1.442695
  %v909 = vpow.pop %v908
  %v910 = vmul.f32 %v873, 1.442695
  %v911 = vpow.pop %v910
  %v912 = vmul.f32 %v874, 1.442695
  %v913 = vpow.pop %v912
  %v914 = vmul.f32 %v875, 1.442695
  %v915 = vpow.pop %v914
  %v916 = vmul.f32 %v876, 1.442695
  %v917 = vpow.pop %v916
  %v918 = vmul.f32 %v877, 1.442695
  %v919 = vpow.pop %v918
  %v920 = vmul.f32 %v878, 1.442695
  %v921 = vpow.pop %v920
  %v922 = vmul.f32 %v879, 1.442695
  %v923 = vpow.pop %v922
  %v924 = vmul.f32 %v880, 1.442695
  %v925 = vpow.pop %v924
  %v926 = vmul.f32 %v881, 1.442695
  %v927 = vpow.pop %v926
  %v928 = vmul.f32 %v882, 1.442695
  %v929 = vpow.pop %v928
  %v930 = vmul.f32 %v883, 1.442695
  %v931 = vpow.pop %v930
  %v932 = vmul.f32 %v884, 1.442695
  %v933 = vpow.pop %v932
  %v934 = vmul.f32 %v885, 1.442695
  %v935 = vpow.pop %v934
  %v936 = vmul.f32 %v886, 1.442695
  %v937 = vpow.pop %v936
  %v938 = vmul.f32 %v887, 1.442695
  %v939 = vpow.pop %v938
  %v940 = vmul.f32 %v888, 1.442695
  %v941 = vpow.pop %v940
  %v942 = vmul.f32 %v889, 1.442695
  %v943 = vpow.pop %v942
  %v944 = vmul.f32 %v890, 1.442695
  %v945 = vpow.pop %v944
  %v946 = vmul.f32 %v891, 1.442695
  %v947 = vpow.pop %v946
  %v948 = vmul.f32 %v892, 1.442695
  %v949 = vpow.pop %v948
  %v950 = vmul.f32 %v893, 1.442695
  %v951 = vpow.pop %v950
  %v952 = vmul.f32 %v894, 1.442695
  %v953 = vpow.pop %v952
  %v954 = vmul.f32 %v895, 1.442695
  %v955 = vpow.pop %v954
  %v956 = vmul.f32 %v896, 1.442695
  %v957 = vpow.pop %v956
  %v958 = vmul.f32 %v897, 1.442695
  %v959 = vpow.pop %v958
  %v960 = vmul.f32 %v898, 1.442695
  %v961 = vpow.pop %v960
  %v962 = vmul.f32 %v899, 1.442695
  %v963 = vpow.pop %v962
  %v964 = vadd.f32 %v901, 1.0
  %v965 = vadd.f32 %v903, 1.0
  %v966 = vadd.f32 %v905, 1.0
  %v967 = vadd.f32 %v907, 1.0
  %v968 = vadd.f32 %v909, 1.0
  %v969 = vadd.f32 %v911, 1.0
  %v970 = vadd.f32 %v913, 1.0
  %v971 = vadd.f32 %v915, 1.0
  %v972 = vadd.f32 %v917, 1.0
  %v973 = vadd.f32 %v919, 1.0
  %v974 = vadd.f32 %v921, 1.0
  %v975 = vadd.f32 %v923, 1.0
  %v976 = vadd.f32 %v925, 1.0
  %v977 = vadd.f32 %v927, 1.0
  %v978 = vadd.f32 %v929, 1.0
  %v979 = vadd.f32 %v931, 1.0
  %v980 = vadd.f32 %v933, 1.0
  %v981 = vadd.f32 %v935, 1.0
  %v982 = vadd.f32 %v937, 1.0
  %v983 = vadd.f32 %v939, 1.0
  %v984 = vadd.f32 %v941, 1.0
  %v985 = vadd.f32 %v943, 1.0
  %v986 = vadd.f32 %v945, 1.0
  %v987 = vadd.f32 %v947, 1.0
  %v988 = vadd.f32 %v949, 1.0
  %v989 = vadd.f32 %v951, 1.0
  %v990 = vadd.f32 %v953, 1.0
  %v991 = vadd.f32 %v955, 1.0
  %v992 = vadd.f32 %v957, 1.0
  %v993 = vadd.f32 %v959, 1.0
  %v994 = vadd.f32 %v961, 1.0
  %v995 = vadd.f32 %v963, 1.0
  %v996 = vrcp.pop %v964
  %v997 = vmul.f32 1.0, %v996
  %v998 = vrcp.pop %v965
  %v999 = vmul.f32 1.0, %v998
  %v1000 = vrcp.pop %v966
  %v1001 = vmul.f32 1.0, %v1000
  %v1002 = vrcp.pop %v967
  %v1003 = vmul.f32 1.0, %v1002
  %v1004 = vrcp.pop %v968
  %v1005 = vmul.f32 1.0, %v1004
  %v1006 = vrcp.pop %v969
  %v1007 = vmul.f32 1.0, %v1006
  %v1008 = vrcp.pop %v970
  %v1009 = vmul.f32 1.0, %v1008
  %v1010 = vrcp.pop %v971
  %v1011 = vmul.f32 1.0, %v1010
  %v1012 = vrcp.pop %v972
  %v1013 = vmul.f32 1.0, %v1012
  %v1014 = vrcp.pop %v973
  %v1015 = vmul.f32 1.0, %v1014
  %v1016 = vrcp.pop %v974
  %v1017 = vmul.f32 1.0, %v1016
  %v1018 = vrcp.pop %v975
  %v1019 = vmul.f32 1.0, %v1018
  %v1020 = vrcp.pop %v976
  %v1021 = vmul.f32 1.0, %v1020
  %v1022 = vrcp.pop %v977
  %v1023 = vmul.f32 1.0, %v1022
  %v1024 = vrcp.pop %v978
  %v1025 = vmul.f32 1.0, %v1024
  %v1026 = vrcp.pop %v979
  %v1027 = vmul.f32 1.0, %v1026
  %v1028 = vrcp.pop %v980
  %v1029 = vmul.f32 1.0, %v1028
  %v1030 = vrcp.pop %v981
  %v1031 = vmul.f32 1.0, %v1030
  %v1032 = vrcp.pop %v982
  %v1033 = vmul.f32 1.0, %v1032
  %v1034 = vrcp.pop %v983
  %v1035 = vmul.f32 1.0, %v1034
  %v1036 = vrcp.pop %v984
  %v1037 = vmul.f32 1.0, %v1036
  %v1038 = vrcp.pop %v985
  %v1039 = vmul.f32 1.0, %v1038
  %v1040 = vrcp.pop %v986
  %v1041 = vmul.f32 1.0, %v1040
  %v1042 = vrcp.pop %v987
  %v1043 = vmul.f32 1.0, %v1042
  %v1044 = vrcp.pop %v988
  %v1045 = vmul.f32 1.0, %v1044
  %v1046 = vrcp.pop %v989
  %v1047 = vmul.f32 1.0, %v1046
  %v1048 = vrcp.pop %v990
  %v1049 = vmul.f32 1.0, %v1048
  %v1050 = vrcp.pop %v991
  %v1051 = vmul.f32 1.0, %v1050
  %v1052 = vrcp.pop %v992
  %v1053 = vmul.f32 1.0, %v1052
  %v1054 = vrcp.pop %v993
  %v1055 = vmul.f32 1.0, %v1054
  %v1056 = vrcp.pop %v994
  %v1057 = vmul.f32 1.0, %v1056
  %v1058 = vrcp.pop %v995
  %v1059 = vmul.f32 1.0, %v1058
  %1060 = vst [vmem:[%s7] sm:$0xff] %v997
  %1061 = vst [vmem:[%s7 + $0x8] sm:$0xff] %v999
  %1062 = vst [vmem:[%s7 + $0x10] sm:$0xff] %v1001
  %1063 = vst [vmem:[%s7 + $0x18] sm:$0xff] %v1003
  %1064 = vst [vmem:[%s7 + $0x20] sm:$0xff] %v1005
  %1065 = vst [vmem:[%s7 + $0x28] sm:$0xff] %v1007
  %1066 = vst [vmem:[%s7 + $0x30] sm:$0xff] %v1009
  %1067 = vst [vmem:[%s7 + $0x38] sm:$0xff] %v1011
  %1068 = vst [vmem:[%s7 + $0x40] sm:$0xff] %v1013
  %1069 = vst [vmem:[%s7 + $0x48] sm:$0xff] %v1015
  %1070 = vst [vmem:[%s7 + $0x50] sm:$0xff] %v1017
  %1071 = vst [vmem:[%s7 + $0x58] sm:$0xff] %v1019
  %1072 = vst [vmem:[%s7 + $0x60] sm:$0xff] %v1021
  %1073 = vst [vmem:[%s7 + $0x68] sm:$0xff] %v1023
  %1074 = vst [vmem:[%s7 + $0x70] sm:$0xff] %v1025
  %1075 = vst [vmem:[%s7 + $0x78] sm:$0xff] %v1027
  %1076 = vst [vmem:[%s7 + $0x80] sm:$0xff] %v1029
  %1077 = vst [vmem:[%s7 + $0x88] sm:$0xff] %v1031
  %1078 = vst [vmem:[%s7 + $0x90] sm:$0xff] %v1033
  %1079 = vst [vmem:[%s7 + $0x98] sm:$0xff] %v1035
  %1080 = vst [vmem:[%s7 + $0xa0] sm:$0xff] %v1037
  %1081 = vst [vmem:[%s7 + $0xa8] sm:$0xff] %v1039
  %1082 = vst [vmem:[%s7 + $0xb0] sm:$0xff] %v1041
  %1083 = vst [vmem:[%s7 + $0xb8] sm:$0xff] %v1043
  %1084 = vst [vmem:[%s7 + $0xc0] sm:$0xff] %v1045
  %1085 = vst [vmem:[%s7 + $0xc8] sm:$0xff] %v1047
  %1086 = vst [vmem:[%s7 + $0xd0] sm:$0xff] %v1049
  %1087 = vst [vmem:[%s7 + $0xd8] sm:$0xff] %v1051
  %1088 = vst [vmem:[%s7 + $0xe0] sm:$0xff] %v1053
  %1089 = vst [vmem:[%s7 + $0xe8] sm:$0xff] %v1055
  %1090 = vst [vmem:[%s7 + $0xf0] sm:$0xff] %v1057
  %1091 = vst [vmem:[%s7 + $0xf8] sm:$0xff] %v1059
  // Predicated region
  $region30: #{model_fc_forward.1} parent=0 // pred_check
    _
  $region31: #{model_fc_forward.1} parent=0 // pred_check_branch
    %1093 = sbr.rel (0) target = $region33
  $region32: #{model_fc_forward.1} parent=0 // pred_region
    _
  $region33: #{model_fc_forward.1} parent=0 // pred_fallthru
    _
  // Predicated region
  $region34: #{model_fc_forward.1} parent=0 // pred_check
    _
  $region35: #{model_fc_forward.1} parent=0 // pred_check_branch
    %1095 = sbr.rel (0) target = $region37
  $region36: #{model_fc_forward.1} parent=0 // pred_region
    _
  $region37: #{model_fc_forward.1} parent=0 // pred_fallthru
    _

</llo_original>
